<compile_context>
chip_gen: v5e
topology: v5e:2x2
jax: 0.10.0
libtpu: 0.0.40
codegen_flags: <defaults>
</compile_context>

<pallas_src>
import jax
import jax.numpy as jnp
from jax.experimental import pallas as pl
from jax.experimental.pallas import tpu as pltpu


def _round_up(x, m):
    return (x + m - 1) // m * m


def _make_features_kernel(N, HW, M, Np, Mp):
    """conv-as-matmul + folded-BN bias + ReLU + GAP-as-matmul, one grid step."""
    inv_hw = 1.0 / float(HW)

    def kernel(patches_ref, w_ref, bias_ref, out_ref):
        # (Mp, Kp) bf16 @ (Kp, Cp) bf16 -> (Mp, Cp) f32 on the MXU.
        y = jnp.dot(patches_ref[...], w_ref[...],
                    preferred_element_type=jnp.float32)
        # Folded batch-norm bias + ReLU on the VPU, in f32.
        y = jnp.maximum(y + bias_ref[...], 0.0)

        # Build the average-pool matrix in-register (no HBM input): row n
        # averages the HW patch rows of image n; padded rows/cols masked out.
        rows = jax.lax.broadcasted_iota(jnp.int32, (Np, Mp), 0)
        cols = jax.lax.broadcasted_iota(jnp.int32, (Np, Mp), 1)
        start = rows * HW
        sel = (cols >= start) & (cols < start + HW) & (cols < M) & (rows < N)
        pool = jnp.where(sel, inv_hw, 0.0).astype(jnp.float32)

        # GAP as an MXU matmul: (Np, Mp) @ (Mp, Cp) -> lane-dense (Np, Cp).
        out_ref[...] = jnp.dot(pool, y, preferred_element_type=jnp.float32)

    return kernel


def finetune_features(x_nchw, conv_w, gamma, beta, run_mean, run_var, eps=1e-5):
    """Pallas implementation of FineTuneModel.forward (features path).

    x_nchw : (N, C, H, W) float32        -- PyTorch NCHW input
    conv_w : (Cout, C, 3, 3) float32     -- PyTorch OIHW conv weight
    returns: (N, Cout, 1, 1) float32     -- ResNet-style features output
    """
    N, C, H, W = x_nchw.shape
    Cout = conv_w.shape[0]
    HW = H * W
    M = N * HW
    K = 9 * C

    # Lane/sublane-aligned padded sizes.
    Mp = _round_up(M, 16)          # bf16 sublane-friendly
    Kp = _round_up(K, 128)
    Cp = _round_up(Cout, 128)
    Np = _round_up(N, 8)           # one output row per image, sublane-aligned

    # ---- wrapper-side layout prep (tiny at these shapes, fused by XLA) ------
    # im2col: NCHW -> NHWC, 3x3 "same" taps concatenated along the lane axis.
    x_nhwc = jnp.transpose(x_nchw, (0, 2, 3, 1)).astype(jnp.bfloat16)
    xpad = jnp.pad(x_nhwc, ((0, 0), (1, 1), (1, 1), (0, 0)))
    taps = [xpad[:, dy:dy + H, dx:dx + W, :] for dy in range(3) for dx in range(3)]
    patches = jnp.concatenate(taps, axis=-1).reshape(M, K)          # (M, 9*C) bf16
    patches = jnp.pad(patches, ((0, Mp - M), (0, Kp - K)))

    # Fold BN (eval mode) scale into the conv weights; keep only the bias.
    scale = gamma / jnp.sqrt(run_var + eps)                          # (Cout,)
    bias = beta - run_mean * scale                                   # (Cout,)
    w_hwio = jnp.transpose(conv_w, (2, 3, 1, 0))                     # (3,3,C,Cout)
    w_mat = (w_hwio * scale[None, None, None, :]).reshape(K, Cout)   # BN folded
    w_mat = jnp.pad(w_mat, ((0, Kp - K), (0, Cp - Cout))).astype(jnp.bfloat16)
    bias_row = jnp.pad(bias, (0, Cp - Cout)).reshape(1, Cp).astype(jnp.float32)

    kernel = _make_features_kernel(N, HW, M, Np, Mp)

    cost = pl.CostEstimate(
        flops=2 * Mp * Kp * Cp + 2 * Np * Mp * Cp,
        transcendentals=0,
        bytes_accessed=(patches.size * 2 + w_mat.size * 2
                        + bias_row.size * 4 + Np * Cp * 4),
    )

    out = pl.pallas_call(
        kernel,
        out_shape=jax.ShapeDtypeStruct((Np, Cp), jnp.float32),
        grid_spec=pltpu.PrefetchScalarGridSpec(
            num_scalar_prefetch=0,
            grid=(1,),                       # whole problem in one grid step
            in_specs=[
                pl.BlockSpec((Mp, Kp), lambda i: (0, 0)),
                pl.BlockSpec((Kp, Cp), lambda i: (0, 0)),
                pl.BlockSpec((1, Cp), lambda i: (0, 0)),
            ],
            out_specs=pl.BlockSpec((Np, Cp), lambda i: (0, 0)),
        ),
        compiler_params=pltpu.CompilerParams(
            dimension_semantics=("arbitrary",),
            vmem_limit_bytes=32 * 1024 * 1024,
        ),
        cost_estimate=cost,
    )(patches, w_mat, bias_row)

    # Strip padding; PyTorch features output shape is (N, num_ftrs, 1, 1).
    return out[:N, :Cout].reshape(N, Cout, 1, 1)


def _reference_features(x_nchw, conv_w, gamma, beta, run_mean, run_var, eps=1e-5):
    """Plain-JAX (f32) reference for correctness checking."""
    out = jax.lax.conv_general_dilated(
        x_nchw, conv_w, window_strides=(1, 1), padding="SAME",
        dimension_numbers=("NCHW", "OIHW", "NCHW"))
    scale = (gamma / jnp.sqrt(run_var + eps)).reshape(1, -1, 1, 1)
    bias = (beta - run_mean * gamma / jnp.sqrt(run_var + eps)).reshape(1, -1, 1, 1)
    out = jnp.maximum(out * scale + bias, 0.0)
    return jnp.mean(out, axis=(2, 3), keepdims=True)


if __name__ == "__main__":
    # Small shapes consistent with the module's forward: NCHW image input.
    N, C, H, W = 2, 4, 16, 16
    Cout = 32           # num_ftrs of the synthetic backbone
    num_classes = 10    # classifier exists in __init__ but is unused in forward

    key = jax.random.PRNGKey(0)
    kx, kw, kg, kb, km, kv = jax.random.split(key, 6)

    x = jax.random.normal(kx, (N, C, H, W), jnp.float32)
    conv_w = jax.random.normal(kw, (Cout, C, 3, 3), jnp.float32) * 0.1
    gamma = 1.0 + 0.1 * jax.random.normal(kg, (Cout,), jnp.float32)
    beta = 0.1 * jax.random.normal(kb, (Cout,), jnp.float32)
    run_mean = 0.1 * jax.random.normal(km, (Cout,), jnp.float32)
    run_var = jnp.abs(jax.random.normal(kv, (Cout,), jnp.float32)) + 0.5

    # Jit the wrapper so the im2col / BN-folding prep fuses with the kernel.
    features_fn = jax.jit(finetune_features)
    f = jax.block_until_ready(
        features_fn(x, conv_w, gamma, beta, run_mean, run_var))
    ref = _reference_features(x, conv_w, gamma, beta, run_mean, run_var)

    assert f.shape == (N, Cout, 1, 1), f.shape
    # bf16 matmul operands (f32 accumulation) vs an all-f32 reference:
    # tolerance loosened accordingly.
    assert jnp.allclose(f, ref, atol=2e-2, rtol=2e-2), "mismatch vs reference"

    print("KERNEL_OK")
</pallas_src>

<mosaic_0001>
module attributes {stable_mosaic.version = 11 : i64} {
  func.func @kernel(%arg0: i32, %arg1: memref<512x128xbf16, #tpu.memory_space<vmem>>, %arg2: memref<128x128xbf16, #tpu.memory_space<vmem>>, %arg3: memref<1x128xf32, #tpu.memory_space<vmem>>, %arg4: memref<8x128xf32, #tpu.memory_space<vmem>>) attributes {dimension_semantics = [#tpu.dimension_semantics<arbitrary>], iteration_bounds = array<i64: 1>, scalar_prefetch = 0 : i64, scratch_operands = 0 : i64, tpu.core_type = #tpu.core_type<tc>, window_params = [{pipeline_mode = #tpu.pipeline_mode<synchronous>, transform_indices = @transform_0, window_bounds = array<i64: 512, 128>}, {pipeline_mode = #tpu.pipeline_mode<synchronous>, transform_indices = @transform_1, window_bounds = array<i64: 128, 128>}, {pipeline_mode = #tpu.pipeline_mode<synchronous>, transform_indices = @transform_2, window_bounds = array<i64: 1, 128>}, {pipeline_mode = #tpu.pipeline_mode<synchronous>, transform_indices = @transform_3, window_bounds = array<i64: 8, 128>}]} {
    %c0 = arith.constant 0 : index
    %c0_0 = arith.constant 0 : index
    %0 = vector.load %arg1[%c0, %c0_0] : memref<512x128xbf16, #tpu.memory_space<vmem>>, vector<512x128xbf16>
    %c0_1 = arith.constant 0 : index
    %c0_2 = arith.constant 0 : index
    %1 = vector.load %arg2[%c0_1, %c0_2] : memref<128x128xbf16, #tpu.memory_space<vmem>>, vector<128x128xbf16>
    %cst = arith.constant dense<0.000000e+00> : vector<512x128xf32>
    %2 = tpu.matmul %0, %1, %cst {dimension_numbers = #tpu.dot_dimension_numbers<[1], [0], [0], [1], [0, 0, 1, 1], [], []>} : vector<512x128xbf16>, vector<128x128xbf16>, vector<512x128xf32> -> vector<512x128xf32>
    %c0_3 = arith.constant 0 : index
    %c0_4 = arith.constant 0 : index
    %3 = vector.load %arg3[%c0_3, %c0_4] : memref<1x128xf32, #tpu.memory_space<vmem>>, vector<1x128xf32>
    %4 = vector.broadcast %3 : vector<1x128xf32> to vector<512x128xf32>
    %5 = arith.addf %2, %4 : vector<512x128xf32>
    %cst_5 = arith.constant 0.000000e+00 : f32
    %6 = vector.broadcast %cst_5 : f32 to vector<512x128xf32>
    %7 = arith.maximumf %5, %6 : vector<512x128xf32>
    %8 = tpu.iota {dimensions = array<i32: 0>} : vector<8x512xi32>
    %9 = tpu.iota {dimensions = array<i32: 1>} : vector<8x512xi32>
    %c256_i32 = arith.constant 256 : i32
    %10 = vector.broadcast %c256_i32 : i32 to vector<8x512xi32>
    %11 = arith.muli %8, %10 : vector<8x512xi32>
    %12 = arith.cmpi sge, %9, %11 : vector<8x512xi32>
    %c256_i32_6 = arith.constant 256 : i32
    %13 = vector.broadcast %c256_i32_6 : i32 to vector<8x512xi32>
    %14 = arith.addi %11, %13 : vector<8x512xi32>
    %15 = arith.cmpi slt, %9, %14 : vector<8x512xi32>
    %16 = arith.andi %12, %15 : vector<8x512xi1>
    %c512_i32 = arith.constant 512 : i32
    %17 = vector.broadcast %c512_i32 : i32 to vector<8x512xi32>
    %18 = arith.cmpi slt, %9, %17 : vector<8x512xi32>
    %19 = arith.andi %16, %18 : vector<8x512xi1>
    %c2_i32 = arith.constant 2 : i32
    %20 = vector.broadcast %c2_i32 : i32 to vector<8x512xi32>
    %21 = arith.cmpi slt, %8, %20 : vector<8x512xi32>
    %22 = arith.andi %19, %21 : vector<8x512xi1>
    %cst_7 = arith.constant 3.906250e-03 : f32
    %cst_8 = arith.constant 0.000000e+00 : f32
    %23 = vector.broadcast %cst_7 : f32 to vector<8x512xf32>
    %24 = vector.broadcast %cst_8 : f32 to vector<8x512xf32>
    %25 = arith.select %22, %23, %24 : vector<8x512xi1>, vector<8x512xf32>
    %cst_9 = arith.constant dense<0.000000e+00> : vector<8x128xf32>
    %26 = tpu.matmul %25, %7, %cst_9 {dimension_numbers = #tpu.dot_dimension_numbers<[1], [0], [0], [1], [0, 0, 1, 1], [], []>} : vector<8x512xf32>, vector<512x128xf32>, vector<8x128xf32> -> vector<8x128xf32>
    %c0_10 = arith.constant 0 : index
    %c0_11 = arith.constant 0 : index
    %27 = vector.load %arg4[%c0_10, %c0_11] : memref<8x128xf32, #tpu.memory_space<vmem>>, vector<8x128xf32>
    tpu.vector_store %arg4[%c0_10, %c0_11], %26 {strides = array<i32>} : memref<8x128xf32, #tpu.memory_space<vmem>>, vector<8x128xf32>,
    return
  }
  func.func @transform_0(%arg0: i32) -> (i32, i32) {
    %c0_i32 = arith.constant 0 : i32
    %c0_i32_0 = arith.constant 0 : i32
    %c0_i32_1 = arith.constant 0 : i32
    return %c0_i32, %c0_i32_0 : i32, i32
  }
  func.func @transform_1(%arg0: i32) -> (i32, i32) {
    %c0_i32 = arith.constant 0 : i32
    %c0_i32_0 = arith.constant 0 : i32
    %c0_i32_1 = arith.constant 0 : i32
    return %c0_i32, %c0_i32_0 : i32, i32
  }
  func.func @transform_2(%arg0: i32) -> (i32, i32) {
    %c0_i32 = arith.constant 0 : i32
    %c0_i32_0 = arith.constant 0 : i32
    %c0_i32_1 = arith.constant 0 : i32
    return %c0_i32, %c0_i32_0 : i32, i32
  }
  func.func @transform_3(%arg0: i32) -> (i32, i32) {
    %c0_i32 = arith.constant 0 : i32
    %c0_i32_0 = arith.constant 0 : i32
    %c0_i32_1 = arith.constant 0 : i32
    return %c0_i32, %c0_i32_0 : i32, i32
  }
}

</mosaic_0001>

<llo_original>
// kernel: finetune_features.1
$region0: #{finetune_features.1}
  #allocation0 [shape = 'u32[]', space=smem, size = 0x4, offset = 0x4, fixed_abs, tag = 'smem constant byte address 0x4 - core index']
  #allocation1 [shape = 'u32[72,128]{1,0:T(1,128)}', space=vmem, size = 0x9000, scoped, tag = 'internal scratch']
  %s0 = inlined_call_operand.vmem [shape: bf16[512,128], index: 0, kind: input, shape index: {}]
  %s1 = inlined_call_operand.vmem [shape: bf16[128,128], index: 1, kind: input, shape index: {}]
  %s2 = inlined_call_operand.vmem [shape: f32[1,128], index: 2, kind: input, shape index: {}]
  %s3 = inlined_call_operand.vmem [shape: f32[8,128], index: 3, kind: output, shape index: {}]
  %s4 = sld [smem:[#allocation0]]
  $region22: #{finetune_features.1} parent=0
    _
  %s6 = ssub.s32 1, %s4
  %s7 = scalar_select 0, %s6, %s4
  // Predicated region
  $region2: #{finetune_features.1} parent=0 // pred_check
    _
  $region3: #{finetune_features.1} parent=0 // pred_check_branch
    %9 = sbr.rel (0) target = $region5
  $region4: #{finetune_features.1} parent=0 // pred_region
    _
  $region5: #{finetune_features.1} parent=0 // pred_fallthru
    _
  // Predicated region
  $region6: #{finetune_features.1} parent=0 // pred_check
    _
  $region7: #{finetune_features.1} parent=0 // pred_check_branch
    %11 = sbr.rel (0) target = $region9
  $region8: #{finetune_features.1} parent=0 // pred_region
    _
  $region9: #{finetune_features.1} parent=0 // pred_fallthru
    _
  // Predicated region
  $region10: #{finetune_features.1} parent=0 // pred_check
    _
  $region11: #{finetune_features.1} parent=0 // pred_check_branch
    %13 = sbr.rel (0) target = $region13
  $region12: #{finetune_features.1} parent=0 // pred_region
    _
  $region13: #{finetune_features.1} parent=0 // pred_fallthru
    _
  %v14 = vld [vmem:[%s0] sm:$0xf]
  %v15 = vld [vmem:[%s0 + $0x4] sm:$0xf]
  %v16 = vld [vmem:[%s0 + $0x8] sm:$0xf]
  %v17 = vld [vmem:[%s0 + $0xc] sm:$0xf]
  %v18 = vld [vmem:[%s0 + $0x10] sm:$0xf]
  %v19 = vld [vmem:[%s0 + $0x14] sm:$0xf]
  %v20 = vld [vmem:[%s0 + $0x18] sm:$0xf]
  %v21 = vld [vmem:[%s0 + $0x1c] sm:$0xf]
  %v22 = vld [vmem:[%s0 + $0x20] sm:$0xf]
  %v23 = vld [vmem:[%s0 + $0x24] sm:$0xf]
  %v24 = vld [vmem:[%s0 + $0x28] sm:$0xf]
  %v25 = vld [vmem:[%s0 + $0x2c] sm:$0xf]
  %v26 = vld [vmem:[%s0 + $0x30] sm:$0xf]
  %v27 = vld [vmem:[%s0 + $0x34] sm:$0xf]
  %v28 = vld [vmem:[%s0 + $0x38] sm:$0xf]
  %v29 = vld [vmem:[%s0 + $0x3c] sm:$0xf]
  %v30 = vld [vmem:[%s0 + $0x40] sm:$0xf]
  %v31 = vld [vmem:[%s0 + $0x44] sm:$0xf]
  %v32 = vld [vmem:[%s0 + $0x48] sm:$0xf]
  %v33 = vld [vmem:[%s0 + $0x4c] sm:$0xf]
  %v34 = vld [vmem:[%s0 + $0x50] sm:$0xf]
  %v35 = vld [vmem:[%s0 + $0x54] sm:$0xf]
  %v36 = vld [vmem:[%s0 + $0x58] sm:$0xf]
  %v37 = vld [vmem:[%s0 + $0x5c] sm:$0xf]
  %v38 = vld [vmem:[%s0 + $0x60] sm:$0xf]
  %v39 = vld [vmem:[%s0 + $0x64] sm:$0xf]
  %v40 = vld [vmem:[%s0 + $0x68] sm:$0xf]
  %v41 = vld [vmem:[%s0 + $0x6c] sm:$0xf]
  %v42 = vld [vmem:[%s0 + $0x70] sm:$0xf]
  %v43 = vld [vmem:[%s0 + $0x74] sm:$0xf]
  %v44 = vld [vmem:[%s0 + $0x78] sm:$0xf]
  %v45 = vld [vmem:[%s0 + $0x7c] sm:$0xf]
  %v46 = vld [vmem:[%s0 + $0x80] sm:$0xf]
  %v47 = vld [vmem:[%s0 + $0x84] sm:$0xf]
  %v48 = vld [vmem:[%s0 + $0x88] sm:$0xf]
  %v49 = vld [vmem:[%s0 + $0x8c] sm:$0xf]
  %v50 = vld [vmem:[%s0 + $0x90] sm:$0xf]
  %v51 = vld [vmem:[%s0 + $0x94] sm:$0xf]
  %v52 = vld [vmem:[%s0 + $0x98] sm:$0xf]
  %v53 = vld [vmem:[%s0 + $0x9c] sm:$0xf]
  %v54 = vld [vmem:[%s0 + $0xa0] sm:$0xf]
  %v55 = vld [vmem:[%s0 + $0xa4] sm:$0xf]
  %v56 = vld [vmem:[%s0 + $0xa8] sm:$0xf]
  %v57 = vld [vmem:[%s0 + $0xac] sm:$0xf]
  %v58 = vld [vmem:[%s0 + $0xb0] sm:$0xf]
  %v59 = vld [vmem:[%s0 + $0xb4] sm:$0xf]
  %v60 = vld [vmem:[%s0 + $0xb8] sm:$0xf]
  %v61 = vld [vmem:[%s0 + $0xbc] sm:$0xf]
  %v62 = vld [vmem:[%s0 + $0xc0] sm:$0xf]
  %v63 = vld [vmem:[%s0 + $0xc4] sm:$0xf]
  %v64 = vld [vmem:[%s0 + $0xc8] sm:$0xf]
  %v65 = vld [vmem:[%s0 + $0xcc] sm:$0xf]
  %v66 = vld [vmem:[%s0 + $0xd0] sm:$0xf]
  %v67 = vld [vmem:[%s0 + $0xd4] sm:$0xf]
  %v68 = vld [vmem:[%s0 + $0xd8] sm:$0xf]
  %v69 = vld [vmem:[%s0 + $0xdc] sm:$0xf]
  %v70 = vld [vmem:[%s0 + $0xe0] sm:$0xf]
  %v71 = vld [vmem:[%s0 + $0xe4] sm:$0xf]
  %v72 = vld [vmem:[%s0 + $0xe8] sm:$0xf]
  %v73 = vld [vmem:[%s0 + $0xec] sm:$0xf]
  %v74 = vld [vmem:[%s0 + $0xf0] sm:$0xf]
  %v75 = vld [vmem:[%s0 + $0xf4] sm:$0xf]
  %v76 = vld [vmem:[%s0 + $0xf8] sm:$0xf]
  %v77 = vld [vmem:[%s0 + $0xfc] sm:$0xf]
  %v78 = vld [vmem:[%s1] sm:$0xf]
  %v79 = vld [vmem:[%s1 + $0x4] sm:$0xf]
  %v80 = vld [vmem:[%s1 + $0x8] sm:$0xf]
  %v81 = vld [vmem:[%s1 + $0xc] sm:$0xf]
  %v82 = vld [vmem:[%s1 + $0x10] sm:$0xf]
  %v83 = vld [vmem:[%s1 + $0x14] sm:$0xf]
  %v84 = vld [vmem:[%s1 + $0x18] sm:$0xf]
  %v85 = vld [vmem:[%s1 + $0x1c] sm:$0xf]
  %v86 = vld [vmem:[%s1 + $0x20] sm:$0xf]
  %v87 = vld [vmem:[%s1 + $0x24] sm:$0xf]
  %v88 = vld [vmem:[%s1 + $0x28] sm:$0xf]
  %v89 = vld [vmem:[%s1 + $0x2c] sm:$0xf]
  %v90 = vld [vmem:[%s1 + $0x30] sm:$0xf]
  %v91 = vld [vmem:[%s1 + $0x34] sm:$0xf]
  %v92 = vld [vmem:[%s1 + $0x38] sm:$0xf]
  %v93 = vld [vmem:[%s1 + $0x3c] sm:$0xf]
  %v94 = vld [vmem:[%s2] sm:$0x1]
  %v96 = vperm.slane %v94, 0
  %v162 = vunpack.c.l.b16 %v14
  %v163 = vunpack.c.l.b16 %v15
  %v164 = vunpack.c.l.b16 %v16
  %v165 = vunpack.c.l.b16 %v17
  %v166 = vunpack.c.l.b16 %v18
  %v167 = vunpack.c.l.b16 %v19
  %v168 = vunpack.c.l.b16 %v20
  %v169 = vunpack.c.l.b16 %v21
  %v170 = vunpack.c.l.b16 %v22
  %v171 = vunpack.c.l.b16 %v23
  %v172 = vunpack.c.l.b16 %v24
  %v173 = vunpack.c.l.b16 %v25
  %v174 = vunpack.c.l.b16 %v26
  %v175 = vunpack.c.l.b16 %v27
  %v176 = vunpack.c.l.b16 %v28
  %v177 = vunpack.c.l.b16 %v29
  %v178 = vunpack.c.l.b16 %v30
  %v179 = vunpack.c.l.b16 %v31
  %v180 = vunpack.c.l.b16 %v32
  %v181 = vunpack.c.l.b16 %v33
  %v182 = vunpack.c.l.b16 %v34
  %v183 = vunpack.c.l.b16 %v35
  %v184 = vunpack.c.l.b16 %v36
  %v185 = vunpack.c.l.b16 %v37
  %v186 = vunpack.c.l.b16 %v38
  %v187 = vunpack.c.l.b16 %v39
  %v188 = vunpack.c.l.b16 %v40
  %v189 = vunpack.c.l.b16 %v41
  %v190 = vunpack.c.l.b16 %v42
  %v191 = vunpack.c.l.b16 %v43
  %v192 = vunpack.c.l.b16 %v44
  %v193 = vunpack.c.l.b16 %v45
  %v194 = vunpack.c.l.b16 %v46
  %v195 = vunpack.c.l.b16 %v47
  %v196 = vunpack.c.l.b16 %v48
  %v197 = vunpack.c.l.b16 %v49
  %v198 = vunpack.c.l.b16 %v50
  %v199 = vunpack.c.l.b16 %v51
  %v200 = vunpack.c.l.b16 %v52
  %v201 = vunpack.c.l.b16 %v53
  %v202 = vunpack.c.l.b16 %v54
  %v203 = vunpack.c.l.b16 %v55
  %v204 = vunpack.c.l.b16 %v56
  %v205 = vunpack.c.l.b16 %v57
  %v206 = vunpack.c.l.b16 %v58
  %v207 = vunpack.c.l.b16 %v59
  %v208 = vunpack.c.l.b16 %v60
  %v209 = vunpack.c.l.b16 %v61
  %v210 = vunpack.c.l.b16 %v62
  %v211 = vunpack.c.l.b16 %v63
  %v212 = vunpack.c.l.b16 %v64
  %v213 = vunpack.c.l.b16 %v65
  %v214 = vunpack.c.l.b16 %v66
  %v215 = vunpack.c.l.b16 %v67
  %v216 = vunpack.c.l.b16 %v68
  %v217 = vunpack.c.l.b16 %v69
  %v218 = vunpack.c.l.b16 %v70
  %v219 = vunpack.c.l.b16 %v71
  %v220 = vunpack.c.l.b16 %v72
  %v221 = vunpack.c.l.b16 %v73
  %v222 = vunpack.c.l.b16 %v74
  %v223 = vunpack.c.l.b16 %v75
  %v224 = vunpack.c.l.b16 %v76
  %v225 = vunpack.c.l.b16 %v77
  %v226 = vpack.c.b16 %v163, %v162
  %v227 = vpack.c.b16 %v165, %v164
  %v228 = vpack.c.b16 %v167, %v166
  %v229 = vpack.c.b16 %v169, %v168
  %v230 = vpack.c.b16 %v171, %v170
  %v231 = vpack.c.b16 %v173, %v172
  %v232 = vpack.c.b16 %v175, %v174
  %v233 = vpack.c.b16 %v177, %v176
  %v234 = vpack.c.b16 %v179, %v178
  %v235 = vpack.c.b16 %v181, %v180
  %v236 = vpack.c.b16 %v183, %v182
  %v237 = vpack.c.b16 %v185, %v184
  %v238 = vpack.c.b16 %v187, %v186
  %v239 = vpack.c.b16 %v189, %v188
  %v240 = vpack.c.b16 %v191, %v190
  %v241 = vpack.c.b16 %v193, %v192
  %v242 = vpack.c.b16 %v195, %v194
  %v243 = vpack.c.b16 %v197, %v196
  %v244 = vpack.c.b16 %v199, %v198
  %v245 = vpack.c.b16 %v201, %v200
  %v246 = vpack.c.b16 %v203, %v202
  %v247 = vpack.c.b16 %v205, %v204
  %v248 = vpack.c.b16 %v207, %v206
  %v249 = vpack.c.b16 %v209, %v208
  %v250 = vpack.c.b16 %v211, %v210
  %v251 = vpack.c.b16 %v213, %v212
  %v252 = vpack.c.b16 %v215, %v214
  %v253 = vpack.c.b16 %v217, %v216
  %v254 = vpack.c.b16 %v219, %v218
  %v255 = vpack.c.b16 %v221, %v220
  %v256 = vpack.c.b16 %v223, %v222
  %v257 = vpack.c.b16 %v225, %v224
  %v306 = vunpack.c.l.b16 %v78
  %v307 = vunpack.c.l.b16 %v79
  %v308 = vunpack.c.l.b16 %v80
  %v309 = vunpack.c.l.b16 %v81
  %v310 = vunpack.c.l.b16 %v82
  %v311 = vunpack.c.l.b16 %v83
  %v312 = vunpack.c.l.b16 %v84
  %v313 = vunpack.c.l.b16 %v85
  %v314 = vunpack.c.l.b16 %v86
  %v315 = vunpack.c.l.b16 %v87
  %v316 = vunpack.c.l.b16 %v88
  %v317 = vunpack.c.l.b16 %v89
  %v318 = vunpack.c.l.b16 %v90
  %v319 = vunpack.c.l.b16 %v91
  %v320 = vunpack.c.l.b16 %v92
  %v321 = vunpack.c.l.b16 %v93
  %v322 = vpack.c.b16 %v307, %v306
  %v323 = vpack.c.b16 %v309, %v308
  %v324 = vpack.c.b16 %v311, %v310
  %v325 = vpack.c.b16 %v313, %v312
  %v326 = vpack.c.b16 %v315, %v314
  %v327 = vpack.c.b16 %v317, %v316
  %v328 = vpack.c.b16 %v319, %v318
  %v329 = vpack.c.b16 %v321, %v320
  %338 = vmatpush.bf16.msra.mxu0 %v329
  %339 = vmatpush.bf16.msra.mxu0 %v328
  %340 = vmatpush.bf16.msra.mxu0 %v327
  %341 = vmatpush.bf16.msra.mxu0 %v326
  %342 = vmatpush.bf16.msra.mxu0 %v325
  %343 = vmatpush.bf16.msra.mxu0 %v324
  %344 = vmatpush.bf16.msra.mxu0 %v323
  %345 = vmatpush.bf16.msra.mxu0 %v322
  %346 = vmatmul.bf16.gmra.mxu0 %v226
  %v347 = vpop.f32.mrf.mxu0
  %v348 = vadd.f32 %v96, %v347
  %v349 = vpop.f32.mrf.mxu0
  %v350 = vadd.f32 %v96, %v349
  %351 = vmatmul.bf16.gmra.mxu0 %v227
  %v352 = vpop.f32.mrf.mxu0
  %v353 = vadd.f32 %v96, %v352
  %v354 = vpop.f32.mrf.mxu0
  %v355 = vadd.f32 %v96, %v354
  %356 = vmatmul.bf16.gmra.mxu0 %v228
  %v357 = vpop.f32.mrf.mxu0
  %v358 = vadd.f32 %v96, %v357
  %v359 = vpop.f32.mrf.mxu0
  %v360 = vadd.f32 %v96, %v359
  %361 = vmatmul.bf16.gmra.mxu0 %v229
  %v362 = vpop.f32.mrf.mxu0
  %v363 = vadd.f32 %v96, %v362
  %v364 = vpop.f32.mrf.mxu0
  %v365 = vadd.f32 %v96, %v364
  %366 = vmatmul.bf16.gmra.mxu0 %v230
  %v367 = vpop.f32.mrf.mxu0
  %v368 = vadd.f32 %v96, %v367
  %v369 = vpop.f32.mrf.mxu0
  %v370 = vadd.f32 %v96, %v369
  %371 = vmatmul.bf16.gmra.mxu0 %v231
  %v372 = vpop.f32.mrf.mxu0
  %v373 = vadd.f32 %v96, %v372
  %v374 = vpop.f32.mrf.mxu0
  %v375 = vadd.f32 %v96, %v374
  %376 = vmatmul.bf16.gmra.mxu0 %v232
  %v377 = vpop.f32.mrf.mxu0
  %v378 = vadd.f32 %v96, %v377
  %v379 = vpop.f32.mrf.mxu0
  %v380 = vadd.f32 %v96, %v379
  %381 = vmatmul.bf16.gmra.mxu0 %v233
  %v382 = vpop.f32.mrf.mxu0
  %v383 = vadd.f32 %v96, %v382
  %v384 = vpop.f32.mrf.mxu0
  %v385 = vadd.f32 %v96, %v384
  %386 = vmatmul.bf16.gmra.mxu0 %v234
  %v387 = vpop.f32.mrf.mxu0
  %v388 = vadd.f32 %v96, %v387
  %v389 = vpop.f32.mrf.mxu0
  %v390 = vadd.f32 %v96, %v389
  %391 = vmatmul.bf16.gmra.mxu0 %v235
  %v392 = vpop.f32.mrf.mxu0
  %v393 = vadd.f32 %v96, %v392
  %v394 = vpop.f32.mrf.mxu0
  %v395 = vadd.f32 %v96, %v394
  %396 = vmatmul.bf16.gmra.mxu0 %v236
  %v397 = vpop.f32.mrf.mxu0
  %v398 = vadd.f32 %v96, %v397
  %v399 = vpop.f32.mrf.mxu0
  %v400 = vadd.f32 %v96, %v399
  %401 = vmatmul.bf16.gmra.mxu0 %v237
  %v402 = vpop.f32.mrf.mxu0
  %v403 = vadd.f32 %v96, %v402
  %v404 = vpop.f32.mrf.mxu0
  %v405 = vadd.f32 %v96, %v404
  %406 = vmatmul.bf16.gmra.mxu0 %v238
  %v407 = vpop.f32.mrf.mxu0
  %v408 = vadd.f32 %v96, %v407
  %v409 = vpop.f32.mrf.mxu0
  %v410 = vadd.f32 %v96, %v409
  %411 = vmatmul.bf16.gmra.mxu0 %v239
  %v412 = vpop.f32.mrf.mxu0
  %v413 = vadd.f32 %v96, %v412
  %v414 = vpop.f32.mrf.mxu0
  %v415 = vadd.f32 %v96, %v414
  %416 = vmatmul.bf16.gmra.mxu0 %v240
  %v417 = vpop.f32.mrf.mxu0
  %v418 = vadd.f32 %v96, %v417
  %v419 = vpop.f32.mrf.mxu0
  %v420 = vadd.f32 %v96, %v419
  %421 = vmatmul.bf16.gmra.mxu0 %v241
  %v422 = vpop.f32.mrf.mxu0
  %v423 = vadd.f32 %v96, %v422
  %v424 = vpop.f32.mrf.mxu0
  %v425 = vadd.f32 %v96, %v424
  %426 = vmatmul.bf16.gmra.mxu0 %v242
  %v427 = vpop.f32.mrf.mxu0
  %v428 = vadd.f32 %v96, %v427
  %v429 = vpop.f32.mrf.mxu0
  %v430 = vadd.f32 %v96, %v429
  %431 = vmatmul.bf16.gmra.mxu0 %v243
  %v432 = vpop.f32.mrf.mxu0
  %v433 = vadd.f32 %v96, %v432
  %v434 = vpop.f32.mrf.mxu0
  %v435 = vadd.f32 %v96, %v434
  %436 = vmatmul.bf16.gmra.mxu0 %v244
  %v437 = vpop.f32.mrf.mxu0
  %v438 = vadd.f32 %v96, %v437
  %v439 = vpop.f32.mrf.mxu0
  %v440 = vadd.f32 %v96, %v439
  %441 = vmatmul.bf16.gmra.mxu0 %v245
  %v442 = vpop.f32.mrf.mxu0
  %v443 = vadd.f32 %v96, %v442
  %v444 = vpop.f32.mrf.mxu0
  %v445 = vadd.f32 %v96, %v444
  %446 = vmatmul.bf16.gmra.mxu0 %v246
  %v447 = vpop.f32.mrf.mxu0
  %v448 = vadd.f32 %v96, %v447
  %v449 = vpop.f32.mrf.mxu0
  %v450 = vadd.f32 %v96, %v449
  %451 = vmatmul.bf16.gmra.mxu0 %v247
  %v452 = vpop.f32.mrf.mxu0
  %v453 = vadd.f32 %v96, %v452
  %v454 = vpop.f32.mrf.mxu0
  %v455 = vadd.f32 %v96, %v454
  %456 = vmatmul.bf16.gmra.mxu0 %v248
  %v457 = vpop.f32.mrf.mxu0
  %v458 = vadd.f32 %v96, %v457
  %v459 = vpop.f32.mrf.mxu0
  %v460 = vadd.f32 %v96, %v459
  %461 = vmatmul.bf16.gmra.mxu0 %v249
  %v462 = vpop.f32.mrf.mxu0
  %v463 = vadd.f32 %v96, %v462
  %v464 = vpop.f32.mrf.mxu0
  %v465 = vadd.f32 %v96, %v464
  %466 = vmatmul.bf16.gmra.mxu0 %v250
  %v467 = vpop.f32.mrf.mxu0
  %v468 = vadd.f32 %v96, %v467
  %v469 = vpop.f32.mrf.mxu0
  %v470 = vadd.f32 %v96, %v469
  %471 = vmatmul.bf16.gmra.mxu0 %v251
  %v472 = vpop.f32.mrf.mxu0
  %v473 = vadd.f32 %v96, %v472
  %v474 = vpop.f32.mrf.mxu0
  %v475 = vadd.f32 %v96, %v474
  %476 = vmatmul.bf16.gmra.mxu0 %v252
  %v477 = vpop.f32.mrf.mxu0
  %v478 = vadd.f32 %v96, %v477
  %v479 = vpop.f32.mrf.mxu0
  %v480 = vadd.f32 %v96, %v479
  %481 = vmatmul.bf16.gmra.mxu0 %v253
  %v482 = vpop.f32.mrf.mxu0
  %v483 = vadd.f32 %v96, %v482
  %v484 = vpop.f32.mrf.mxu0
  %v485 = vadd.f32 %v96, %v484
  %486 = vmatmul.bf16.gmra.mxu0 %v254
  %v487 = vpop.f32.mrf.mxu0
  %v488 = vadd.f32 %v96, %v487
  %v489 = vpop.f32.mrf.mxu0
  %v490 = vadd.f32 %v96, %v489
  %491 = vmatmul.bf16.gmra.mxu0 %v255
  %v492 = vpop.f32.mrf.mxu0
  %v493 = vadd.f32 %v96, %v492
  %v494 = vpop.f32.mrf.mxu0
  %v495 = vadd.f32 %v96, %v494
  %496 = vmatmul.bf16.gmra.mxu0 %v256
  %v497 = vpop.f32.mrf.mxu0
  %v498 = vadd.f32 %v96, %v497
  %v499 = vpop.f32.mrf.mxu0
  %v500 = vadd.f32 %v96, %v499
  %501 = vmatmul.bf16.gmra.mxu0 %v257
  %v502 = vpop.f32.mrf.mxu0
  %v503 = vadd.f32 %v96, %v502
  %v504 = vpop.f32.mrf.mxu0
  %v505 = vadd.f32 %v96, %v504
  %506 = vdwg.mxu0
  %v507 = vmax.f32 %v348, 0.0
  %v508 = vmax.f32 %v350, 0.0
  %v509 = vmax.f32 %v353, 0.0
  %v510 = vmax.f32 %v355, 0.0
  %v511 = vmax.f32 %v358, 0.0
  %v512 = vmax.f32 %v360, 0.0
  %v513 = vmax.f32 %v363, 0.0
  %v514 = vmax.f32 %v365, 0.0
  %v515 = vmax.f32 %v368, 0.0
  %v516 = vmax.f32 %v370, 0.0
  %v517 = vmax.f32 %v373, 0.0
  %v518 = vmax.f32 %v375, 0.0
  %v519 = vmax.f32 %v378, 0.0
  %v520 = vmax.f32 %v380, 0.0
  %v521 = vmax.f32 %v383, 0.0
  %v522 = vmax.f32 %v385, 0.0
  %v523 = vmax.f32 %v388, 0.0
  %v524 = vmax.f32 %v390, 0.0
  %v525 = vmax.f32 %v393, 0.0
  %v526 = vmax.f32 %v395, 0.0
  %v527 = vmax.f32 %v398, 0.0
  %v528 = vmax.f32 %v400, 0.0
  %v529 = vmax.f32 %v403, 0.0
  %v530 = vmax.f32 %v405, 0.0
  %v531 = vmax.f32 %v408, 0.0
  %v532 = vmax.f32 %v410, 0.0
  %v533 = vmax.f32 %v413, 0.0
  %v534 = vmax.f32 %v415, 0.0
  %v535 = vmax.f32 %v418, 0.0
  %v536 = vmax.f32 %v420, 0.0
  %v537 = vmax.f32 %v423, 0.0
  %v538 = vmax.f32 %v425, 0.0
  %v539 = vmax.f32 %v428, 0.0
  %v540 = vmax.f32 %v430, 0.0
  %v541 = vmax.f32 %v433, 0.0
  %v542 = vmax.f32 %v435, 0.0
  %v543 = vmax.f32 %v438, 0.0
  %v544 = vmax.f32 %v440, 0.0
  %v545 = vmax.f32 %v443, 0.0
  %v546 = vmax.f32 %v445, 0.0
  %v547 = vmax.f32 %v448, 0.0
  %v548 = vmax.f32 %v450, 0.0
  %v549 = vmax.f32 %v453, 0.0
  %v550 = vmax.f32 %v455, 0.0
  %v551 = vmax.f32 %v458, 0.0
  %v552 = vmax.f32 %v460, 0.0
  %v553 = vmax.f32 %v463, 0.0
  %v554 = vmax.f32 %v465, 0.0
  %v555 = vmax.f32 %v468, 0.0
  %v556 = vmax.f32 %v470, 0.0
  %v557 = vmax.f32 %v473, 0.0
  %v558 = vmax.f32 %v475, 0.0
  %v559 = vmax.f32 %v478, 0.0
  %v560 = vmax.f32 %v480, 0.0
  %v561 = vmax.f32 %v483, 0.0
  %v562 = vmax.f32 %v485, 0.0
  %v563 = vmax.f32 %v488, 0.0
  %v564 = vmax.f32 %v490, 0.0
  %v565 = vmax.f32 %v493, 0.0
  %v566 = vmax.f32 %v495, 0.0
  %v567 = vmax.f32 %v498, 0.0
  %v568 = vmax.f32 %v500, 0.0
  %v569 = vmax.f32 %v503, 0.0
  %v570 = vmax.f32 %v505, 0.0
  %v571 = vlaneseq
  %v572 = vshrl.u32 %v571, 7
  %v573 = vlaneseq
  %v574 = vand.u32 %v573, 127
  %v575 = vadd.s32 %v574, 128
  %v576 = vadd.s32 %v574, 256
  %v577 = vadd.s32 %v574, 384
  %v578 = vmul.u32 %v572, 256
  %vm579 = vcmp.ge.s32.totalorder %v574, %v578
  %vm580 = vcmp.ge.s32.totalorder %v575, %v578
  %vm581 = vcmp.ge.s32.totalorder %v576, %v578
  %vm582 = vcmp.ge.s32.totalorder %v577, %v578
  %v583 = vadd.s32 %v578, 256
  %vm584 = vcmp.lt.s32.totalorder %v574, %v583
  %vm585 = vcmp.lt.s32.totalorder %v575, %v583
  %vm586 = vcmp.lt.s32.totalorder %v576, %v583
  %vm587 = vcmp.lt.s32.totalorder %v577, %v583
  %vm588 = vmand %vm579, %vm584
  %vm589 = vmand %vm580, %vm585
  %vm590 = vmand %vm581, %vm586
  %vm591 = vmand %vm582, %vm587
  %vm592 = vcmp.lt.s32.totalorder %v574, 512
  %vm593 = vcmp.lt.s32.totalorder %v575, 512
  %vm594 = vcmp.lt.s32.totalorder %v576, 512
  %vm595 = vcmp.lt.s32.totalorder %v577, 512
  %vm596 = vmand %vm588, %vm592
  %vm597 = vmand %vm589, %vm593
  %vm598 = vmand %vm590, %vm594
  %vm599 = vmand %vm591, %vm595
  %vm600 = vcmp.lt.s32.totalorder %v572, 2
  %vm601 = vmand %vm596, %vm600
  %vm602 = vmand %vm597, %vm600
  %vm603 = vmand %vm598, %vm600
  %vm604 = vmand %vm599, %vm600
  %v605 = vsel %vm601, 0.00390625, 0.0
  %v606 = vsel %vm602, 0.00390625, 0.0
  %v607 = vsel %vm603, 0.00390625, 0.0
  %v608 = vsel %vm604, 0.00390625, 0.0
  %609 = vmatpush.msra.mxu0 %v522
  %610 = vmatpush.msra.mxu0 %v521
  %611 = vmatpush.msra.mxu0 %v520
  %612 = vmatpush.msra.mxu0 %v519
  %613 = vmatpush.msra.mxu0 %v518
  %614 = vmatpush.msra.mxu0 %v517
  %615 = vmatpush.msra.mxu0 %v516
  %616 = vmatpush.msra.mxu0 %v515
  %617 = vmatpush.msra.mxu0 %v514
  %618 = vmatpush.msra.mxu0 %v513
  %619 = vmatpush.msra.mxu0 %v512
  %620 = vmatpush.msra.mxu0 %v511
  %621 = vmatpush.msra.mxu0 %v510
  %622 = vmatpush.msra.mxu0 %v509
  %623 = vmatpush.msra.mxu0 %v508
  %624 = vmatpush.msra.mxu0 %v507
  %625 = vmatmul.f32.gmra.mxu0 %v605
  %v626 = vpop.f32.mrf.mxu0
  %v627 = vadd.f32 0.0, %v626
  %628 = vdwg.mxu0
  %629 = vmatpush.msra.mxu0 %v538
  %630 = vmatpush.msra.mxu0 %v537
  %631 = vmatpush.msra.mxu0 %v536
  %632 = vmatpush.msra.mxu0 %v535
  %633 = vmatpush.msra.mxu0 %v534
  %634 = vmatpush.msra.mxu0 %v533
  %635 = vmatpush.msra.mxu0 %v532
  %636 = vmatpush.msra.mxu0 %v531
  %637 = vmatpush.msra.mxu0 %v530
  %638 = vmatpush.msra.mxu0 %v529
  %639 = vmatpush.msra.mxu0 %v528
  %640 = vmatpush.msra.mxu0 %v527
  %641 = vmatpush.msra.mxu0 %v526
  %642 = vmatpush.msra.mxu0 %v525
  %643 = vmatpush.msra.mxu0 %v524
  %644 = vmatpush.msra.mxu0 %v523
  %645 = vmatmul.f32.gmra.mxu0 %v606
  %v646 = vpop.f32.mrf.mxu0
  %v647 = vadd.f32 %v627, %v646
  %648 = vdwg.mxu0
  %649 = vmatpush.msra.mxu0 %v554
  %650 = vmatpush.msra.mxu0 %v553
  %651 = vmatpush.msra.mxu0 %v552
  %652 = vmatpush.msra.mxu0 %v551
  %653 = vmatpush.msra.mxu0 %v550
  %654 = vmatpush.msra.mxu0 %v549
  %655 = vmatpush.msra.mxu0 %v548
  %656 = vmatpush.msra.mxu0 %v547
  %657 = vmatpush.msra.mxu0 %v546
  %658 = vmatpush.msra.mxu0 %v545
  %659 = vmatpush.msra.mxu0 %v544
  %660 = vmatpush.msra.mxu0 %v543
  %661 = vmatpush.msra.mxu0 %v542
  %662 = vmatpush.msra.mxu0 %v541
  %663 = vmatpush.msra.mxu0 %v540
  %664 = vmatpush.msra.mxu0 %v539
  %665 = vmatmul.f32.gmra.mxu0 %v607
  %v666 = vpop.f32.mrf.mxu0
  %v667 = vadd.f32 %v647, %v666
  %668 = vdwg.mxu0
  %669 = vmatpush.msra.mxu0 %v570
  %670 = vmatpush.msra.mxu0 %v569
  %671 = vmatpush.msra.mxu0 %v568
  %672 = vmatpush.msra.mxu0 %v567
  %673 = vmatpush.msra.mxu0 %v566
  %674 = vmatpush.msra.mxu0 %v565
  %675 = vmatpush.msra.mxu0 %v564
  %676 = vmatpush.msra.mxu0 %v563
  %677 = vmatpush.msra.mxu0 %v562
  %678 = vmatpush.msra.mxu0 %v561
  %679 = vmatpush.msra.mxu0 %v560
  %680 = vmatpush.msra.mxu0 %v559
  %681 = vmatpush.msra.mxu0 %v558
  %682 = vmatpush.msra.mxu0 %v557
  %683 = vmatpush.msra.mxu0 %v556
  %684 = vmatpush.msra.mxu0 %v555
  %685 = vmatmul.f32.gmra.mxu0 %v608
  %v686 = vpop.f32.mrf.mxu0
  %v687 = vadd.f32 %v667, %v686
  %688 = vdwg.mxu0
  %689 = vst [vmem:[%s3] sm:$0xff] %v687
  // Predicated region
  $region14: #{finetune_features.1} parent=0 // pred_check
    _
  $region15: #{finetune_features.1} parent=0 // pred_check_branch
    %691 = sbr.rel (0) target = $region17
  $region16: #{finetune_features.1} parent=0 // pred_region
    _
  $region17: #{finetune_features.1} parent=0 // pred_fallthru
    _
  // Predicated region
  $region18: #{finetune_features.1} parent=0 // pred_check
    _
  $region19: #{finetune_features.1} parent=0 // pred_check_branch
    %693 = sbr.rel (0) target = $region21
  $region20: #{finetune_features.1} parent=0 // pred_region
    _
  $region21: #{finetune_features.1} parent=0 // pred_fallthru
    _

</llo_original>
